<compile_context>
chip_gen: v6e
topology: v6e:2x2x1
jax: 0.10.0
libtpu: 0.0.40
codegen_flags: <defaults>
</compile_context>

<pallas_src>
import functools
import math

import jax
import jax.numpy as jnp
from jax.experimental import pallas as pl
from jax.experimental.pallas import tpu as pltpu

LANES = 128
SUBLANES = 8
DEFAULT_BLOCK_ROWS = 8192      # (8192, 128) f32 = 4 MiB per input per step
NCORES = 2                     # leading "parallel" axis (megacore on v7x)
VMEM_LIMIT_BYTES = 48 << 20    # safe on v5e/v6e (128 MiB) and v7x (64 MiB/TC)
_EPS = 1e-12
_LN2 = math.log(2.0)


def _logcosh_kernel(yt_ref, yp_ref, o_ref, acc_ref, *,
                    rows, block_rows, nblocks, ncores, mask_last, has_dup):
    c = pl.program_id(0)       # core / parallel axis
    i = pl.program_id(1)       # reduction axis

    @pl.when(i == 0)
    def _():
        acc_ref[...] = jnp.zeros_like(acc_ref)

    # Logical (unclamped) block index.  The BlockSpec index_map clamps to
    # nblocks-1, so a duplicated remainder block is skipped entirely below
    # (it costs only its DMA).
    b = i * ncores + c

    def partial_sum(masked):
        d = yt_ref[...].astype(jnp.float32) - yp_ref[...].astype(jnp.float32)
        ax = jnp.abs(d + jnp.float32(_EPS))
        # log(cosh(x)) = |x| + log1p(exp(-2|x|)) - ln2 ; the constant -ln2 is
        # hoisted to the wrapper (subtracted once as n_kernel * ln2).
        lc = ax + jnp.log1p(jnp.exp(-2.0 * ax))
        if masked:
            # Row-overhang mask for the last logical block only.
            row = jax.lax.broadcasted_iota(jnp.int32, (block_rows, LANES), 0)
            lc = jnp.where(b * block_rows + row < rows, lc, 0.0)
        # Collapse to an (8, 128) partial with pure VPU adds (no XLU reduce).
        return lc.reshape(-1, SUBLANES, LANES).sum(axis=0)

    if mask_last:
        @pl.when(b < nblocks - 1)
        def _():
            acc_ref[...] += partial_sum(False)      # unmasked fast path

        @pl.when(b == nblocks - 1)
        def _():
            acc_ref[...] += partial_sum(True)       # masked last block
        # b > nblocks - 1 (clamped duplicate): no compute at all.
    elif has_dup:
        @pl.when(b < nblocks)
        def _():
            acc_ref[...] += partial_sum(False)
    else:
        acc_ref[...] += partial_sum(False)

    @pl.when(i == pl.num_programs(1) - 1)
    def _():
        o_ref[...] = acc_ref[...][None]


def log_cosh_loss(y_t, y_prime_t, *, block_rows=DEFAULT_BLOCK_ROWS):
    assert y_t.shape == y_prime_t.shape, "inputs must have identical shapes"
    n = int(y_t.size)
    assert n > 0

    yt = jnp.ravel(y_t)
    yp = jnp.ravel(y_prime_t)

    # Kernel handles the (8*128)-aligned prefix; the <1024-element tail is
    # computed with plain jnp (no full-array pad copies).
    chunk = SUBLANES * LANES
    n_kernel = (n // chunk) * chunk

    total = jnp.float32(0.0)

    if n_kernel:
        rows = n_kernel // LANES                       # multiple of 8
        br = min(int(block_rows), rows)
        br = max((br // SUBLANES) * SUBLANES, SUBLANES)  # multiple of 8
        nblocks = -(-rows // br)
        ncores = min(NCORES, nblocks)                  # collapse when 1 block
        blocks_per_core = -(-nblocks // ncores)
        mask_last = (rows % br) != 0
        has_dup = (blocks_per_core * ncores) != nblocks

        # Zero-copy in the aligned case; at worst a prefix slice otherwise.
        yt2 = yt[:n_kernel].reshape(rows, LANES)
        yp2 = yp[:n_kernel].reshape(rows, LANES)

        kernel = functools.partial(
            _logcosh_kernel, rows=rows, block_rows=br, nblocks=nblocks,
            ncores=ncores, mask_last=mask_last, has_dup=has_dup)

        def in_map(c, i):
            # Strided block ownership per core; clamp the (skipped) remainder.
            return (jnp.minimum(i * ncores + c, nblocks - 1), 0)

        itemsize = jnp.dtype(y_t.dtype).itemsize
        partials = pl.pallas_call(
            kernel,
            out_shape=jax.ShapeDtypeStruct((ncores, SUBLANES, LANES),
                                           jnp.float32),
            grid_spec=pltpu.PrefetchScalarGridSpec(
                num_scalar_prefetch=0,
                grid=(ncores, blocks_per_core),
                in_specs=[
                    pl.BlockSpec((br, LANES), in_map),
                    pl.BlockSpec((br, LANES), in_map),
                ],
                out_specs=pl.BlockSpec((1, SUBLANES, LANES),
                                       lambda c, i: (c, 0, 0)),
                scratch_shapes=[pltpu.VMEM((SUBLANES, LANES), jnp.float32)],
            ),
            compiler_params=pltpu.CompilerParams(
                dimension_semantics=("parallel", "arbitrary"),
                vmem_limit_bytes=VMEM_LIMIT_BYTES),
            cost_estimate=pl.CostEstimate(
                flops=8 * n_kernel,
                transcendentals=2 * n_kernel,
                bytes_accessed=2 * n_kernel * itemsize),
        )(yt2, yp2)

        # Cheap cross-lane / cross-core reduce + hoisted -ln2 constant.
        total = total + (jnp.sum(partials) - jnp.float32(n_kernel * _LN2))

    if n_kernel < n:
        # Ragged tail (< 1024 elements): plain jnp, same stable formula.
        dt = (yt[n_kernel:].astype(jnp.float32)
              - yp[n_kernel:].astype(jnp.float32))
        a = jnp.abs(dt + jnp.float32(_EPS))
        total = total + jnp.sum(a + jnp.log1p(jnp.exp(-2.0 * a))
                                - jnp.float32(_LN2))

    return total / jnp.float32(n)


def _reference(y_t, y_prime_t):
    return jnp.mean(jnp.log(jnp.cosh((y_t - y_prime_t) + 1e-12)))


if __name__ == "__main__":
    key = jax.random.PRNGKey(0)
    k1, k2, k3, k4, k5, k6 = jax.random.split(key, 6)

    # Primary small case consistent with a regression loss over NCHW maps.
    shape = (2, 4, 16, 16)
    y_t = jax.random.normal(k1, shape, dtype=jnp.float32)
    y_prime_t = jax.random.normal(k2, shape, dtype=jnp.float32)
    loss = log_cosh_loss(y_t, y_prime_t)
    jax.block_until_ready(loss)
    ref = _reference(y_t, y_prime_t)
    assert jnp.allclose(loss, ref, rtol=1e-5, atol=1e-6), (loss, ref)

    # Ragged element count (exercises the aligned-prefix + jnp-tail path).
    a = jax.random.normal(k3, (9, 9, 13), dtype=jnp.float32)
    b = jax.random.normal(k4, (9, 9, 13), dtype=jnp.float32)
    loss2 = log_cosh_loss(a, b)
    jax.block_until_ready(loss2)
    assert jnp.allclose(loss2, _reference(a, b), rtol=1e-5, atol=1e-6)

    # Multi-block case with a small block override: exercises the 2-way core
    # split, the skipped clamped-duplicate block, the gated row-overhang mask,
    # and the ragged jnp tail.
    c = jax.random.normal(k5, (427045,), dtype=jnp.float32)
    d = jax.random.normal(k6, (427045,), dtype=jnp.float32)
    loss3 = log_cosh_loss(c, d, block_rows=512)
    jax.block_until_ready(loss3)
    assert jnp.allclose(loss3, _reference(c, d), rtol=1e-4, atol=1e-6)

    print("KERNEL_OK")
</pallas_src>

<mosaic_0001>
module attributes {stable_mosaic.version = 11 : i64} {
  func.func @_logcosh_kernel(%arg0: i32, %arg1: i32, %arg2: memref<16x128xf32, #tpu.memory_space<vmem>>, %arg3: memref<16x128xf32, #tpu.memory_space<vmem>>, %arg4: memref<1x8x128xf32, #tpu.memory_space<vmem>>, %arg5: memref<8x128xf32, #tpu.memory_space<vmem>>) attributes {dimension_semantics = [#tpu.dimension_semantics<parallel>, #tpu.dimension_semantics<arbitrary>], iteration_bounds = array<i64: 1, 1>, scalar_prefetch = 0 : i64, scratch_operands = 1 : i64, tpu.core_type = #tpu.core_type<tc>, window_params = [{transform_indices = @transform_0, window_bounds = array<i64: 16, 128>}, {transform_indices = @transform_1, window_bounds = array<i64: 16, 128>}, {transform_indices = @transform_2, window_bounds = array<i64: 1, 8, 128>}]} {
    %c0_i32 = arith.constant 0 : i32
    %0 = arith.cmpi eq, %arg1, %c0_i32 : i32
    %1 = arith.extui %0 : i1 to i32
    %c0_i32_0 = arith.constant 0 : i32
    %2 = arith.cmpi ne, %1, %c0_i32_0 : i32
    scf.if %2 {
      %cst_12 = arith.constant 0.000000e+00 : f32
      %22 = vector.broadcast %cst_12 : f32 to vector<8x128xf32>
      %c0_13 = arith.constant 0 : index
      %c0_14 = arith.constant 0 : index
      %23 = vector.load %arg5[%c0_13, %c0_14] : memref<8x128xf32, #tpu.memory_space<vmem>>, vector<8x128xf32>
      tpu.vector_store %arg5[%c0_13, %c0_14], %22 {strides = array<i32>} : memref<8x128xf32, #tpu.memory_space<vmem>>, vector<8x128xf32>,
    } else {
    }
    %c0 = arith.constant 0 : index
    %c0_1 = arith.constant 0 : index
    %3 = vector.load %arg5[%c0, %c0_1] : memref<8x128xf32, #tpu.memory_space<vmem>>, vector<8x128xf32>
    %c0_2 = arith.constant 0 : index
    %c0_3 = arith.constant 0 : index
    %4 = vector.load %arg2[%c0_2, %c0_3] : memref<16x128xf32, #tpu.memory_space<vmem>>, vector<16x128xf32>
    %c0_4 = arith.constant 0 : index
    %c0_5 = arith.constant 0 : index
    %5 = vector.load %arg3[%c0_4, %c0_5] : memref<16x128xf32, #tpu.memory_space<vmem>>, vector<16x128xf32>
    %6 = arith.subf %4, %5 : vector<16x128xf32>
    %cst = arith.constant 9.99999996E-13 : f32
    %7 = vector.broadcast %cst : f32 to vector<16x128xf32>
    %8 = arith.addf %6, %7 : vector<16x128xf32>
    %9 = math.absf %8 : vector<16x128xf32>
    %cst_6 = arith.constant -2.000000e+00 : f32
    %10 = vector.broadcast %cst_6 : f32 to vector<16x128xf32>
    %11 = arith.mulf %10, %9 : vector<16x128xf32>
    %12 = math.exp %11 : vector<16x128xf32>
    %13 = math.log1p %12 : vector<16x128xf32>
    %14 = arith.addf %9, %13 : vector<16x128xf32>
    %15 = vector.shape_cast %14 : vector<16x128xf32> to vector<2x8x128xf32>
    %cst_7 = arith.constant dense<0.000000e+00> : vector<8x128xf32>
    %16 = vector.multi_reduction <add>, %15, %cst_7 [0] : vector<2x8x128xf32> to vector<8x128xf32>
    %17 = arith.addf %3, %16 : vector<8x128xf32>
    %c0_8 = arith.constant 0 : index
    %c0_9 = arith.constant 0 : index
    %18 = vector.load %arg5[%c0_8, %c0_9] : memref<8x128xf32, #tpu.memory_space<vmem>>, vector<8x128xf32>
    tpu.vector_store %arg5[%c0_8, %c0_9], %17 {strides = array<i32>} : memref<8x128xf32, #tpu.memory_space<vmem>>, vector<8x128xf32>,
    %c0_i32_10 = arith.constant 0 : i32
    %19 = arith.cmpi eq, %arg1, %c0_i32_10 : i32
    %20 = arith.extui %19 : i1 to i32
    %c0_i32_11 = arith.constant 0 : i32
    %21 = arith.cmpi ne, %20, %c0_i32_11 : i32
    scf.if %21 {
      %c0_12 = arith.constant 0 : index
      %c0_13 = arith.constant 0 : index
      %22 = vector.load %arg5[%c0_12, %c0_13] : memref<8x128xf32, #tpu.memory_space<vmem>>, vector<8x128xf32>
      %23 = vector.shape_cast %22 : vector<8x128xf32> to vector<1x8x128xf32>
      %c0_14 = arith.constant 0 : index
      %c0_15 = arith.constant 0 : index
      %c0_16 = arith.constant 0 : index
      %24 = vector.load %arg4[%c0_14, %c0_15, %c0_16] : memref<1x8x128xf32, #tpu.memory_space<vmem>>, vector<1x8x128xf32>
      tpu.vector_store %arg4[%c0_14, %c0_15, %c0_16], %23 {strides = array<i32>} : memref<1x8x128xf32, #tpu.memory_space<vmem>>, vector<1x8x128xf32>,
    } else {
    }
    return
  }
  func.func @transform_0(%arg0: i32, %arg1: i32) -> (i32, i32) {
    %c1_i32 = arith.constant 1 : i32
    %0 = arith.muli %arg1, %c1_i32 : i32
    %1 = arith.addi %0, %arg0 : i32
    %c0_i32 = arith.constant 0 : i32
    %2 = arith.minsi %1, %c0_i32 : i32
    %c0_i32_0 = arith.constant 0 : i32
    %c0_i32_1 = arith.constant 0 : i32
    return %2, %c0_i32_0 : i32, i32
  }
  func.func @transform_1(%arg0: i32, %arg1: i32) -> (i32, i32) {
    %c1_i32 = arith.constant 1 : i32
    %0 = arith.muli %arg1, %c1_i32 : i32
    %1 = arith.addi %0, %arg0 : i32
    %c0_i32 = arith.constant 0 : i32
    %2 = arith.minsi %1, %c0_i32 : i32
    %c0_i32_0 = arith.constant 0 : i32
    %c0_i32_1 = arith.constant 0 : i32
    return %2, %c0_i32_0 : i32, i32
  }
  func.func @transform_2(%arg0: i32, %arg1: i32) -> (i32, i32, i32) {
    %c0_i32 = arith.constant 0 : i32
    %c0_i32_0 = arith.constant 0 : i32
    %c0_i32_1 = arith.constant 0 : i32
    return %arg0, %c0_i32, %c0_i32_0 : i32, i32, i32
  }
}

</mosaic_0001>

<llo_original>
// kernel: tpu_custom_call.1
$region0: #{tpu_custom_call.1}
  #allocation0 [shape = 'u32[]', space=smem, size = 0x4, offset = 0x4, fixed_abs, tag = 'smem constant byte address 0x4 - core index']
  #allocation1 [shape = 'u32[144,128]{1,0:T(1,128)}', space=vmem, size = 0x12000, scoped, tag = 'internal scratch']
  #allocation2 [shape = 'f32[8,128]{1,0:T(8,128)}', space=vmem, size = 0x1000, scoped, tag = 'scratch operand']
  %s0 = inlined_call_operand.hbm [shape: f32[16,128], index: 0, kind: input, shape index: {}]
  %s1 = inlined_call_operand.hbm [shape: f32[16,128], index: 1, kind: input, shape index: {}]
  %s2 = inlined_call_operand.hbm [shape: f32[1,8,128], index: 2, kind: output, shape index: {}]
  %s3 = sld [smem:[#allocation0]]
  $region34: #{tpu_custom_call.1} parent=0
    _
  %s5 = ssub.s32 1, %s3
  %s6 = scalar_select 0, %s5, %s3
  $region1: #{tpu_custom_call.1} parent=0
    #allocation3 [shape = 'u8[8192]{0}', space=vmem, size = 0x2000, scoped, tag = 'input window, operand 0, single buffered']
    #allocation4 [shape = 's32[1]{0}', space=sflag, size = 0x4, scoped, tag = 'scoped memory for tpu_custom_call.1']
    #allocation5 [shape = 's32[1]{0}', space=sflag, size = 0x4, scoped, tag = 'scoped memory for tpu_custom_call.1']
    #allocation6 [shape = 'u8[8192]{0}', space=vmem, size = 0x2000, scoped, tag = 'input window, operand 1, single buffered']
    #allocation7 [shape = 's32[1]{0}', space=sflag, size = 0x4, scoped, tag = 'scoped memory for tpu_custom_call.1']
    #allocation8 [shape = 'u8[4096]{0}', space=vmem, size = 0x1000, scoped, tag = 'output window, operand 0, single buffered']
    %7 = vsyncpa [#allocation4], 0
    %8 = vsyncpa [#allocation7], 0
    %9 = vsyncpa [#allocation5], 0
    // Predicated region
    $region2: #{tpu_custom_call.1} parent=1 // pred_check
      _
    $region3: #{tpu_custom_call.1} parent=1 // pred_check_branch
      %11 = sbr.rel (0) target = $region5
    $region4: #{tpu_custom_call.1} parent=1 // pred_region
      %s12 = sadd.s32 0, 0
      %p13 = scmp.lt.s32.totalorder %s12, 0
      %s14 = scalar_select %p13, %s12, 0
      %s15 = smul.u32 2, %s14
      %s17 = ssub.s32 256, 256
      %18 = vsyncadd [#allocation4], %s17
      %s19 = smul.addr %s15, 128
      %s20 = scalar_lea.hbm %s0, %s19
      %s21 = sshll.u32 [#allocation3], 4
      %s22 = int_to_ptr.vmem [resolvable:$true] %s21
      %27 = dma.hbm_to_vmem [thread:$0]  %s20, 256, %s22, [#allocation4], 128, 128, 8
    $region5: #{tpu_custom_call.1} parent=1 // pred_fallthru
      _
    // Predicated region
    $region6: #{tpu_custom_call.1} parent=1 // pred_check
      _
    $region7: #{tpu_custom_call.1} parent=1 // pred_check_branch
      %29 = sbr.rel (0) target = $region9
    $region8: #{tpu_custom_call.1} parent=1 // pred_region
      %s30 = sadd.s32 0, 0
      %p31 = scmp.lt.s32.totalorder %s30, 0
      %s32 = scalar_select %p31, %s30, 0
      %s33 = smul.u32 2, %s32
      %s35 = ssub.s32 256, 256
      %36 = vsyncadd [#allocation7], %s35
      %s37 = smul.addr %s33, 128
      %s38 = scalar_lea.hbm %s1, %s37
      %s39 = sshll.u32 [#allocation6], 4
      %s40 = int_to_ptr.vmem [resolvable:$true] %s39
      %45 = dma.hbm_to_vmem [thread:$0]  %s38, 256, %s40, [#allocation7], 128, 128, 8
    $region9: #{tpu_custom_call.1} parent=1 // pred_fallthru
      _
    // Predicated region
    $region10: #{tpu_custom_call.1} parent=1 // pred_check
      _
    $region11: #{tpu_custom_call.1} parent=1 // pred_check_branch
      %47 = sbr.rel (0) target = $region13
    $region12: #{tpu_custom_call.1} parent=1 // pred_region
      %48 = dma.done [#allocation4], 256
    $region13: #{tpu_custom_call.1} parent=1 // pred_fallthru
      _
    // Predicated region
    $region14: #{tpu_custom_call.1} parent=1 // pred_check
      _
    $region15: #{tpu_custom_call.1} parent=1 // pred_check_branch
      %50 = sbr.rel (0) target = $region17
    $region16: #{tpu_custom_call.1} parent=1 // pred_region
      %51 = dma.done [#allocation7], 256
    $region17: #{tpu_custom_call.1} parent=1 // pred_fallthru
      _
    %s52 = sadd.s32 0, 0
    %p53 = scmp.lt.s32.totalorder %s52, 0
    %s54 = scalar_select %p53, %s52, 0
    %s55 = smul.u32 2, %s54
    %s56 = sadd.s32 0, 0
    %p57 = scmp.lt.s32.totalorder %s56, 0
    %s58 = scalar_select %p57, %s56, 0
    %s59 = smul.u32 2, %s58
    %p60 = scmp.eq.s32.totalorder 0, 0
    // Predicated region
    $region18: #{tpu_custom_call.1} parent=1 // pred_check
      %p61 = pneg %p60
    $region19: #{tpu_custom_call.1} parent=1 // pred_check_branch
      %63 = sbr.rel (%p61) target = $region21
    $region20: #{tpu_custom_call.1} parent=1 // pred_region
      %64 = vst [vmem:[#allocation2] sm:$0xff] 0.0
    $region21: #{tpu_custom_call.1} parent=1 // pred_fallthru
      _
    %v65 = vld [vmem:[#allocation2] sm:$0xff]
    %v66 = vld [vmem:[#allocation3] sm:$0xff]
    %v67 = vld [vmem:[#allocation3 + $0x8] sm:$0xff]
    %v68 = vld [vmem:[#allocation6] sm:$0xff]
    %v69 = vld [vmem:[#allocation6 + $0x8] sm:$0xff]
    %v70 = vsub.f32 %v66, %v68
    %v71 = vsub.f32 %v67, %v69
    %v72 = vadd.f32 %v70, 1e-12
    %v73 = vadd.f32 %v71, 1e-12
    %v74 = vand.u32 2147483647, %v72
    %v75 = vand.u32 2147483647, %v73
    %v76 = vmul.f32 %v74, -2.0
    %v77 = vmul.f32 %v75, -2.0
    %v78 = vmul.f32 %v76, 1.442695
    %v79 = vpow.pop %v78
    %v80 = vmul.f32 %v77, 1.442695
    %v81 = vpow.pop %v80
    %v82 = vadd.f32 %v79, 1.0
    %v83 = vlog2.pop %v82
    %v84 = vmul.f32 %v83, 0.6931472
    %v85 = vmul.f32 -0.5, %v79
    %v86 = vadd.f32 %v85, 1.0
    %v87 = vmul.f32 %v86, %v79
    %v88 = vand.u32 2147483647, %v79
    %vm89 = vcmp.lt.f32.partialorder %v88, 0.0004427343
    %v90 = vsel %vm89, %v87, %v84
    %v91 = vadd.f32 %v81, 1.0
    %v92 = vlog2.pop %v91
    %v93 = vmul.f32 %v92, 0.6931472
    %v94 = vmul.f32 -0.5, %v81
    %v95 = vadd.f32 %v94, 1.0
    %v96 = vmul.f32 %v95, %v81
    %v97 = vand.u32 2147483647, %v81
    %vm98 = vcmp.lt.f32.partialorder %v97, 0.0004427343
    %v99 = vsel %vm98, %v96, %v93
    %v100 = vadd.f32 %v74, %v90
    %v101 = vadd.f32 %v75, %v99
    %v102 = vadd.f32 %v100, %v101
    %v103 = vadd.f32 %v65, %v102
    %104 = vst [vmem:[#allocation2] sm:$0xff] %v103
    // Predicated region
    $region22: #{tpu_custom_call.1} parent=1 // pred_check
      %p105 = pneg %p60
    $region23: #{tpu_custom_call.1} parent=1 // pred_check_branch
      %107 = sbr.rel (%p105) target = $region25
    $region24: #{tpu_custom_call.1} parent=1 // pred_region
      %v108 = vld [vmem:[#allocation2] sm:$0xff]
      %109 = vst [vmem:[#allocation8] sm:$0xff] %v108
    $region25: #{tpu_custom_call.1} parent=1 // pred_fallthru
      _
    // Predicated region
    $region26: #{tpu_custom_call.1} parent=1 // pred_check
      _
    $region27: #{tpu_custom_call.1} parent=1 // pred_check_branch
      %111 = sbr.rel (0) target = $region29
    $region28: #{tpu_custom_call.1} parent=1 // pred_region
      %s113 = ssub.s32 128, 128
      %114 = vsyncadd [#allocation5], %s113
      %s116 = sshll.u32 [#allocation8], 4
      %s117 = int_to_ptr.vmem [resolvable:$true] %s116
      %119 = dma.vmem_to_hbm [thread:$0]  %s117, 128, %s2, [#allocation5]
    $region29: #{tpu_custom_call.1} parent=1 // pred_fallthru
      _
    // Predicated region
    $region30: #{tpu_custom_call.1} parent=1 // pred_check
      _
    $region31: #{tpu_custom_call.1} parent=1 // pred_check_branch
      %121 = sbr.rel (0) target = $region33
    $region32: #{tpu_custom_call.1} parent=1 // pred_region
      %122 = dma.done [#allocation5], 128
    $region33: #{tpu_custom_call.1} parent=1 // pred_fallthru
      _
    %123 = vsyncpa [#allocation4], 1
    %124 = vsyncpa [#allocation7], 1
    %125 = vsyncpa [#allocation5], 1

</llo_original>
